<compile_context>
chip_gen: v6e
topology: v6e:2x2x1
jax: 0.10.0
libtpu: 0.0.40
codegen_flags: <defaults>
</compile_context>

<pallas_src>
import jax
import jax.numpy as jnp
from jax.experimental import pallas as pl
from jax.experimental.pallas import tpu as pltpu


def _round_up(x, m):
    return (x + m - 1) // m * m


# ----------------------------- Pallas kernel --------------------------------

def _encoder_cls_kernel(ids_ref, mask_ref, ew_ref, b_enc_ref,
                        w_cls_ref, b_cls_ref, hidden_ref, score_ref):
    """Fused synthetic encoder + cls_head for one row tile of docs.

    ids_ref:    (R_TILE, 1)   int32  flattened token ids (R_TILE = TILE_BD*T)
    mask_ref:   (R_TILE, 1)   bf16   flattened attention mask (0/1)
    ew_ref:     (V_pad, D)    f32    EW = embedding @ W_enc (resident)
    b_enc_ref:  (1, D)        f32
    w_cls_ref:  (1, D)        f32    cls_head weight (row layout)
    b_cls_ref:  (1, 1)        f32
    hidden_ref: (R_TILE, D)   bf16   "last_hidden_state" tile (flattened rows)
    score_ref:  (TILE_BD, 128) f32   cls score broadcast across lanes
    """
    r_tile, D = hidden_ref.shape
    tile_bd = score_ref.shape[0]
    T = r_tile // tile_bd
    V = ew_ref.shape[0]

    # Fused embedding gather: one-hot(ids) @ EW on the MXU.  Exact row
    # selection of the f32 EW table (0/1 weights), so it matches
    # gather-then-matmul bit-for-bit.
    ids = ids_ref[...]                                               # (r_tile, 1)
    vocab_iota = jax.lax.broadcasted_iota(jnp.int32, (r_tile, V), 1)
    onehot = (ids == vocab_iota).astype(jnp.float32)                 # (r_tile, V)
    h = jnp.dot(onehot, ew_ref[...], preferred_element_type=jnp.float32)

    # Epilogue in f32 (v5e has no bf16 VPU/EUP): bias, tanh, mask.
    h = jnp.tanh(h + b_enc_ref[...])
    h = h * mask_ref[...].astype(jnp.float32)                        # (r_tile, D)

    # bf16 writeback halves the dominant HBM stream.
    hidden_ref[...] = h.astype(hidden_ref.dtype)

    # cls_head: Linear(d_model, 1) on token 0 of each doc, as a VPU/XLU
    # reduction (no N=1 MXU matmul), computed from the in-register value
    # (no VMEM store->load dependency).  Leading-dim split is layout
    # preserving (T % 8 == 0, asserted in the wrapper).
    h0 = h.reshape(tile_bd, T, D)[:, 0, :]                           # (tile_bd, D)
    score = jnp.sum(h0 * w_cls_ref[...], axis=-1, keepdims=True)
    score = score + b_cls_ref[...]
    # Lane-dense output: replicate the score across all 128 lanes.
    score_ref[...] = jnp.broadcast_to(score, score_ref.shape)


def _run_encoder_cls(ids2d, mask2d, params):
    """ids2d: (BD, T) int32, mask2d: (BD, T). Returns hidden (BD, T, D) bf16
    and cls score (BD,) f32."""
    BD, T = ids2d.shape
    V, D = params["embedding"].shape
    assert D % 128 == 0, "d_model must be lane-dense (multiple of 128)"
    assert T % 8 == 0, "token_len must be a multiple of 8 (f32 sublane packing)"

    # EW = embedding @ W_enc computed ONCE (bf16 MXU inputs, f32 accumulation).
    # Valid only because the synthetic encoder is gather -> linear; the kernel
    # then never needs the raw embedding table or W_enc.
    ew = jnp.dot(params["embedding"].astype(jnp.bfloat16),
                 params["w_enc"].astype(jnp.bfloat16),
                 preferred_element_type=jnp.float32)                  # (V, D) f32
    # Pad vocab to a lane-aligned K dim for the one-hot matmul (zero rows are
    # never selected since ids < V).
    V_pad = _round_up(V, 128)
    ew = jnp.pad(ew, ((0, V_pad - V), (0, 0)))

    b_enc = params["b_enc"].astype(jnp.float32).reshape(1, D)
    w_cls = params["w_cls"].reshape(1, D).astype(jnp.float32)
    b_cls = params["b_cls"].reshape(1, 1).astype(jnp.float32)

    # ---- Row-tile selection (docs axis), padding BD instead of shrinking the
    # tile.  Cap chosen so double-buffered ids/mask/hidden tiles + f32
    # intermediates stay far below v7x's 64 MiB VMEM; keep >= 2 grid steps
    # when possible so both v7x TensorCores get work.
    TILE_BD_MAX = 256                       # 256 docs * 16 tok => M = 4096 rows
    if BD <= 8:
        tile_bd = 8
    elif BD <= 2 * TILE_BD_MAX:
        tile_bd = _round_up(pl.cdiv(BD, 2), 8)
    else:
        tile_bd = TILE_BD_MAX
    bd_pad = _round_up(BD, tile_bd)
    grid = (bd_pad // tile_bd,)
    r_tile = tile_bd * T
    R = bd_pad * T

    # Pad + flatten ids/mask.  Padded docs select vocab row 0 and are masked
    # to zero; their scores are sliced off below.
    pad = bd_pad - BD
    ids_flat = jnp.pad(ids2d.astype(jnp.int32), ((0, pad), (0, 0))).reshape(R, 1)
    mask_flat = jnp.pad(mask2d.astype(jnp.bfloat16), ((0, pad), (0, 0))).reshape(R, 1)

    cost = pl.CostEstimate(
        flops=2 * R * V_pad * D + 2 * bd_pad * D,
        transcendentals=R * D,
        bytes_accessed=(R * 4 + R * 2                      # ids + mask in
                        + V_pad * D * 4 + D * 4 + D * 4 + 4  # resident params
                        + R * D * 2                        # hidden out (bf16)
                        + bd_pad * 128 * 4),               # score out
    )

    hidden_flat, score_pad = pl.pallas_call(
        _encoder_cls_kernel,
        out_shape=(
            jax.ShapeDtypeStruct((R, D), jnp.bfloat16),
            jax.ShapeDtypeStruct((bd_pad, 128), jnp.float32),
        ),
        grid_spec=pltpu.PrefetchScalarGridSpec(
            num_scalar_prefetch=0,
            grid=grid,
            in_specs=[
                pl.BlockSpec((r_tile, 1), lambda i: (i, 0)),   # ids
                pl.BlockSpec((r_tile, 1), lambda i: (i, 0)),   # mask
                pl.BlockSpec((V_pad, D), lambda i: (0, 0)),    # EW (resident)
                pl.BlockSpec((1, D), lambda i: (0, 0)),        # b_enc
                pl.BlockSpec((1, D), lambda i: (0, 0)),        # w_cls
                pl.BlockSpec((1, 1), lambda i: (0, 0)),        # b_cls
            ],
            out_specs=(
                pl.BlockSpec((r_tile, D), lambda i: (i, 0)),   # hidden
                pl.BlockSpec((tile_bd, 128), lambda i: (i, 0)),  # score
            ),
        ),
        compiler_params=pltpu.CompilerParams(
            dimension_semantics=("parallel",),      # shard tiles across TCs
            vmem_limit_bytes=48 * 1024 * 1024,      # headroom below v7x 64 MiB
        ),
        cost_estimate=cost,
    )(ids_flat, mask_flat, ew, b_enc, w_cls, b_cls)

    hidden = hidden_flat[:BD * T].reshape(BD, T, D)     # contiguous, cheap
    score = score_pad[:BD, 0]                           # (BD,)
    return hidden, score


# ------------------------------ forward glue ---------------------------------

def encoder_wrapper_forward(input_ids, attention_mask, params, n_docs):
    """Mirrors EncoderWrapper.forward."""
    bsz, doc_num, token_len = input_ids.shape

    # reshape(bsz*doc_num, token_len) / reshape_as
    _input_ids = input_ids.reshape(bsz * doc_num, token_len)
    _attention_mask = attention_mask.reshape(bsz * doc_num, token_len)

    # encoder(...) -> last_hidden_state, plus fused cls_head.
    hidden, cls_score_flat = _run_encoder_cls(_input_ids, _attention_mask, params)

    outputs = hidden.reshape(bsz, doc_num, token_len, -1)       # bf16
    cls_score = cls_score_flat.reshape(bsz, doc_num)            # .squeeze(-1)

    # torch.topk(..., sorted=True)
    k = min(doc_num, n_docs)
    top_values, top_indices = jax.lax.top_k(cls_score, k)

    # input_ids[torch.arange(bsz), top_indices] style batched gathers.
    batch_idx = jnp.arange(bsz)[:, None]
    context_input_ids = input_ids[batch_idx, top_indices]
    context_encoder_outputs = outputs[batch_idx, top_indices]
    context_attention_mask = attention_mask[batch_idx, top_indices]

    return {
        "context_input_ids": context_input_ids,
        "context_attention_mask": context_attention_mask,
        "context_encoder_outputs": context_encoder_outputs,
        "n_doc_scores": top_values,
        "all_doc_scores": cls_score,
        "encoder_hidden_states": outputs,
    }


# ------------------------------ params / main --------------------------------

def init_params(key, vocab, d_model):
    k0, k1, k2, k3 = jax.random.split(key, 4)
    return {
        "embedding": jax.random.normal(k0, (vocab, d_model), jnp.float32) * 0.1,
        "w_enc": jax.random.normal(k1, (d_model, d_model), jnp.float32) * 0.1,
        "b_enc": jnp.zeros((1, d_model), jnp.float32),
        "w_cls": jax.random.normal(k2, (d_model, 1), jnp.float32) * 0.1,
        "b_cls": jax.random.normal(k3, (1, 1), jnp.float32) * 0.1,
    }


if __name__ == "__main__":
    # Small but lane-dense shapes: D_MODEL a multiple of 128, TOKEN_LEN a
    # multiple of 8.  BD = bsz*doc_num = 16 -> TILE_BD = 8, a 2-step parallel
    # grid (one tile per v7x TensorCore).
    BSZ, DOC_NUM, TOKEN_LEN = 2, 8, 16
    VOCAB, D_MODEL = 64, 128
    N_DOCS = 2

    key = jax.random.PRNGKey(0)
    k_ids, k_params = jax.random.split(key)

    input_ids = jax.random.randint(k_ids, (BSZ, DOC_NUM, TOKEN_LEN),
                                   minval=0, maxval=VOCAB, dtype=jnp.int32)
    # Non-trivial mask: every doc has 12 real tokens, 4 padding tokens.
    attention_mask = (jnp.arange(TOKEN_LEN)[None, None, :] < 12).astype(jnp.float32)
    attention_mask = jnp.broadcast_to(attention_mask, (BSZ, DOC_NUM, TOKEN_LEN))
    params = init_params(k_params, VOCAB, D_MODEL)

    out = encoder_wrapper_forward(input_ids, attention_mask, params, N_DOCS)
    jax.block_until_ready(out)

    # Basic shape sanity checks mirroring the torch semantics.
    assert out["context_input_ids"].shape == (BSZ, N_DOCS, TOKEN_LEN)
    assert out["context_attention_mask"].shape == (BSZ, N_DOCS, TOKEN_LEN)
    assert out["context_encoder_outputs"].shape == (BSZ, N_DOCS, TOKEN_LEN, D_MODEL)
    assert out["n_doc_scores"].shape == (BSZ, N_DOCS)
    assert out["all_doc_scores"].shape == (BSZ, DOC_NUM)
    assert out["encoder_hidden_states"].shape == (BSZ, DOC_NUM, TOKEN_LEN, D_MODEL)

    # Numerical check against a pure-JAX reference of the synthetic encoder
    # (bf16 hidden writeback + tanh impl differences -> 2e-2 tolerance).
    ew_ref = jnp.dot(params["embedding"].astype(jnp.bfloat16),
                     params["w_enc"].astype(jnp.bfloat16),
                     preferred_element_type=jnp.float32)
    ids_flat = input_ids.reshape(-1, TOKEN_LEN)
    h_ref = jnp.tanh(jnp.take(ew_ref, ids_flat, axis=0) + params["b_enc"])
    h_ref = h_ref * attention_mask.reshape(-1, TOKEN_LEN, 1)
    h_ref = h_ref.reshape(BSZ, DOC_NUM, TOKEN_LEN, D_MODEL)
    s_ref = (h_ref[:, :, 0] @ params["w_cls"]).squeeze(-1) + params["b_cls"][0, 0]
    assert jnp.allclose(out["encoder_hidden_states"].astype(jnp.float32),
                        h_ref, atol=2e-2)
    assert jnp.allclose(out["all_doc_scores"], s_ref, atol=2e-2)

    # TODO(synk): the real T5 encoder stack (self-attention + FFN layers) is
    # replaced by a single synthetic embedding+projection layer; the in-kernel
    # one-hot gather assumes the small synthetic vocab (a real 32k vocab would
    # use a DMA/row gather of EW instead).
    print("KERNEL_OK")
</pallas_src>

<mosaic_0001>
module attributes {stable_mosaic.version = 11 : i64} {
  func.func @_encoder_cls_kernel(%arg0: i32, %arg1: memref<128x1xi32, #tpu.memory_space<vmem>>, %arg2: memref<128x1xbf16, #tpu.memory_space<vmem>>, %arg3: memref<128x128xf32, #tpu.memory_space<vmem>>, %arg4: memref<1x128xf32, #tpu.memory_space<vmem>>, %arg5: memref<1x128xf32, #tpu.memory_space<vmem>>, %arg6: memref<1x1xf32, #tpu.memory_space<vmem>>, %arg7: memref<128x128xbf16, #tpu.memory_space<vmem>>, %arg8: memref<8x128xf32, #tpu.memory_space<vmem>>) attributes {dimension_semantics = [#tpu.dimension_semantics<parallel>], iteration_bounds = array<i64: 2>, scalar_prefetch = 0 : i64, scratch_operands = 0 : i64, tpu.core_type = #tpu.core_type<tc>, window_params = [{transform_indices = @transform_0, window_bounds = array<i64: 128, 1>}, {transform_indices = @transform_1, window_bounds = array<i64: 128, 1>}, {pipeline_mode = #tpu.pipeline_mode<synchronous>, transform_indices = @transform_2, window_bounds = array<i64: 128, 128>}, {pipeline_mode = #tpu.pipeline_mode<synchronous>, transform_indices = @transform_3, window_bounds = array<i64: 1, 128>}, {pipeline_mode = #tpu.pipeline_mode<synchronous>, transform_indices = @transform_4, window_bounds = array<i64: 1, 128>}, {pipeline_mode = #tpu.pipeline_mode<synchronous>, transform_indices = @transform_5, window_bounds = array<i64: 1, 1>}, {transform_indices = @transform_6, window_bounds = array<i64: 128, 128>}, {transform_indices = @transform_7, window_bounds = array<i64: 8, 128>}]} {
    %c0 = arith.constant 0 : index
    %c0_0 = arith.constant 0 : index
    %0 = vector.load %arg1[%c0, %c0_0] : memref<128x1xi32, #tpu.memory_space<vmem>>, vector<128x1xi32>
    %1 = tpu.iota {dimensions = array<i32: 1>} : vector<128x128xi32>
    %2 = vector.broadcast %0 : vector<128x1xi32> to vector<128x128xi32>
    %3 = arith.cmpi eq, %2, %1 : vector<128x128xi32>
    %4 = arith.extui %3 : vector<128x128xi1> to vector<128x128xi32>
    %5 = arith.sitofp %4 : vector<128x128xi32> to vector<128x128xf32>
    %c0_1 = arith.constant 0 : index
    %c0_2 = arith.constant 0 : index
    %6 = vector.load %arg3[%c0_1, %c0_2] : memref<128x128xf32, #tpu.memory_space<vmem>>, vector<128x128xf32>
    %cst = arith.constant dense<0.000000e+00> : vector<128x128xf32>
    %7 = tpu.matmul %5, %6, %cst {dimension_numbers = #tpu.dot_dimension_numbers<[1], [0], [0], [1], [0, 0, 1, 1], [], []>} : vector<128x128xf32>, vector<128x128xf32>, vector<128x128xf32> -> vector<128x128xf32>
    %c0_3 = arith.constant 0 : index
    %c0_4 = arith.constant 0 : index
    %8 = vector.load %arg4[%c0_3, %c0_4] : memref<1x128xf32, #tpu.memory_space<vmem>>, vector<1x128xf32>
    %9 = vector.broadcast %8 : vector<1x128xf32> to vector<128x128xf32>
    %10 = arith.addf %7, %9 : vector<128x128xf32>
    %11 = math.tanh %10 : vector<128x128xf32>
    %c0_5 = arith.constant 0 : index
    %c0_6 = arith.constant 0 : index
    %12 = vector.load %arg2[%c0_5, %c0_6] : memref<128x1xbf16, #tpu.memory_space<vmem>>, vector<128x1xbf16>
    %13 = arith.extf %12 : vector<128x1xbf16> to vector<128x1xf32>
    %14 = vector.broadcast %13 : vector<128x1xf32> to vector<128x128xf32>
    %15 = arith.mulf %11, %14 : vector<128x128xf32>
    %16 = arith.truncf %15 : vector<128x128xf32> to vector<128x128xbf16>
    %c0_7 = arith.constant 0 : index
    %c0_8 = arith.constant 0 : index
    %17 = vector.load %arg7[%c0_7, %c0_8] : memref<128x128xbf16, #tpu.memory_space<vmem>>, vector<128x128xbf16>
    tpu.vector_store %arg7[%c0_7, %c0_8], %16 {strides = array<i32>} : memref<128x128xbf16, #tpu.memory_space<vmem>>, vector<128x128xbf16>,
    %18 = vector.shape_cast %15 : vector<128x128xf32> to vector<8x16x128xf32>
    %19 = vector.extract_strided_slice %18 {offsets = [0, 0, 0], sizes = [8, 1, 128], strides = [1, 1, 1]} : vector<8x16x128xf32> to vector<8x1x128xf32>
    %20 = vector.shape_cast %19 : vector<8x1x128xf32> to vector<8x128xf32>
    %c0_9 = arith.constant 0 : index
    %c0_10 = arith.constant 0 : index
    %21 = vector.load %arg5[%c0_9, %c0_10] : memref<1x128xf32, #tpu.memory_space<vmem>>, vector<1x128xf32>
    %22 = vector.broadcast %21 : vector<1x128xf32> to vector<8x128xf32>
    %23 = arith.mulf %20, %22 : vector<8x128xf32>
    %cst_11 = arith.constant dense<0.000000e+00> : vector<8xf32>
    %24 = vector.multi_reduction <add>, %23, %cst_11 [1] : vector<8x128xf32> to vector<8xf32>
    %25 = vector.shape_cast %24 : vector<8xf32> to vector<8x1xf32>
    %c0_12 = arith.constant 0 : index
    %c0_13 = arith.constant 0 : index
    %26 = vector.load %arg6[%c0_12, %c0_13] : memref<1x1xf32, #tpu.memory_space<vmem>>, vector<1x1xf32>
    %27 = vector.broadcast %26 : vector<1x1xf32> to vector<8x1xf32>
    %28 = arith.addf %25, %27 : vector<8x1xf32>
    %29 = vector.shape_cast %28 : vector<8x1xf32> to vector<8x1xf32>
    %30 = vector.broadcast %29 : vector<8x1xf32> to vector<8x128xf32>
    %c0_14 = arith.constant 0 : index
    %c0_15 = arith.constant 0 : index
    %31 = vector.load %arg8[%c0_14, %c0_15] : memref<8x128xf32, #tpu.memory_space<vmem>>, vector<8x128xf32>
    tpu.vector_store %arg8[%c0_14, %c0_15], %30 {strides = array<i32>} : memref<8x128xf32, #tpu.memory_space<vmem>>, vector<8x128xf32>,
    return
  }
  func.func @transform_0(%arg0: i32) -> (i32, i32) {
    %c0_i32 = arith.constant 0 : i32
    %c0_i32_0 = arith.constant 0 : i32
    return %arg0, %c0_i32 : i32, i32
  }
  func.func @transform_1(%arg0: i32) -> (i32, i32) {
    %c0_i32 = arith.constant 0 : i32
    %c0_i32_0 = arith.constant 0 : i32
    return %arg0, %c0_i32 : i32, i32
  }
  func.func @transform_2(%arg0: i32) -> (i32, i32) {
    %c0_i32 = arith.constant 0 : i32
    %c0_i32_0 = arith.constant 0 : i32
    %c0_i32_1 = arith.constant 0 : i32
    return %c0_i32, %c0_i32_0 : i32, i32
  }
  func.func @transform_3(%arg0: i32) -> (i32, i32) {
    %c0_i32 = arith.constant 0 : i32
    %c0_i32_0 = arith.constant 0 : i32
    %c0_i32_1 = arith.constant 0 : i32
    return %c0_i32, %c0_i32_0 : i32, i32
  }
  func.func @transform_4(%arg0: i32) -> (i32, i32) {
    %c0_i32 = arith.constant 0 : i32
    %c0_i32_0 = arith.constant 0 : i32
    %c0_i32_1 = arith.constant 0 : i32
    return %c0_i32, %c0_i32_0 : i32, i32
  }
  func.func @transform_5(%arg0: i32) -> (i32, i32) {
    %c0_i32 = arith.constant 0 : i32
    %c0_i32_0 = arith.constant 0 : i32
    %c0_i32_1 = arith.constant 0 : i32
    return %c0_i32, %c0_i32_0 : i32, i32
  }
  func.func @transform_6(%arg0: i32) -> (i32, i32) {
    %c0_i32 = arith.constant 0 : i32
    %c0_i32_0 = arith.constant 0 : i32
    return %arg0, %c0_i32 : i32, i32
  }
  func.func @transform_7(%arg0: i32) -> (i32, i32) {
    %c0_i32 = arith.constant 0 : i32
    %c0_i32_0 = arith.constant 0 : i32
    return %arg0, %c0_i32 : i32, i32
  }
}

</mosaic_0001>

<llo_original>
// kernel: tpu_custom_call.1
$region0: #{tpu_custom_call.1}
  #allocation0 [shape = 'u32[]', space=smem, size = 0x4, offset = 0x4, fixed_abs, tag = 'smem constant byte address 0x4 - core index']
  #allocation1 [shape = 'u32[144,128]{1,0:T(1,128)}', space=vmem, size = 0x12000, scoped, tag = 'internal scratch']
  #allocation2 [shape = 'f32[1,1]{1,0:T(1,128)S(1)}', space=vmem, size = 0x200, scoped, tag = 'scoped memory for tpu_custom_call.1']
  %s0 = inlined_call_operand.vmem [shape: s32[256,1], index: 0, kind: input, shape index: {}]
  %s1 = inlined_call_operand.vmem [shape: bf16[256,1], index: 1, kind: input, shape index: {}]
  %s2 = inlined_call_operand.vmem [shape: f32[128,128], index: 2, kind: input, shape index: {}]
  %s3 = inlined_call_operand.vmem [shape: f32[1,128], index: 3, kind: input, shape index: {}]
  %s4 = inlined_call_operand.vmem [shape: f32[1,128], index: 4, kind: input, shape index: {}]
  %s5 = inlined_call_operand.<no memory space> [shape: f32[1,1], index: 5, kind: input, shape index: {}]
  %s6 = inlined_call_operand.hbm [shape: bf16[256,128], index: 6, kind: output, shape index: {0}]
  %s7 = inlined_call_operand.hbm [shape: f32[16,128], index: 7, kind: output, shape index: {1}]
  %8 = xla_tuple %s6, %s7
  %s9 = sld [smem:[#allocation0]]
  $region65: #{tpu_custom_call.1} parent=0
    _
  %s11 = ssub.s32 1, %s9
  %s12 = scalar_select 0, %s11, %s9
  %v13 = vstv %s5
  %14 = vst [vmem:[#allocation2] sm:$0x1] %v13
  $region1: #{tpu_custom_call.1} parent=0
    #allocation3 [shape = 'u8[65536]{0}', space=vmem, size = 0x10000, scoped, tag = 'output window, operand 0']
    #allocation4 [shape = 's32[2]{0}', space=sflag, size = 0x8, scoped, tag = 'scoped memory for tpu_custom_call.1']
    #allocation5 [shape = 'u8[8192]{0}', space=vmem, size = 0x2000, scoped, tag = 'output window, operand 1']
    #allocation6 [shape = 's32[2]{0}', space=sflag, size = 0x8, scoped, tag = 'scoped memory for tpu_custom_call.1']
    %15 = vsyncpa [#allocation4], 0
    %s16 = scalar_lea.sflag [#allocation4], 1
    %17 = vsyncpa %s16, 0
    %18 = vsyncpa [#allocation6], 0
    %s19 = scalar_lea.sflag [#allocation6], 1
    %20 = vsyncpa %s19, 0
    loop: start=0, step=1, limit=4
    $region2: #{tpu_custom_call.1} parent=1 // loop_pre_header
      _
    $region3: #{tpu_custom_call.1} parent=1 // loop_header
      %s22 = sphi 0, %s26
      %p23 = scmp.ge.s32.totalorder %s22, 4
      %s32 = sphi 0, %s34
      %s35 = sphi 0, %s32
      %s36 = sphi 0, %s35
      %s52 = sphi 0, %s36
      %s58 = sphi 0, %s60
      %s61 = sphi 0, %s58
      %s62 = sphi 0, %s61
      %s78 = sphi 0, %s62
      %s82 = sphi 0, %s82
      %s84 = sphi 0, %s82
      %s85 = sphi 0, %s84
      %s99 = sphi 0, %s85
      %s103 = sphi 0, %s103
      %s105 = sphi 0, %s103
      %s106 = sphi 0, %s105
      %s120 = sphi 0, %s106
      %s124 = sphi 0, %s124
      %s126 = sphi 0, %s124
      %s127 = sphi 0, %s126
      %s141 = sphi 0, %s127
      %s145 = sphi 0, %s145
      %s147 = sphi 0, %s145
      %s148 = sphi 0, %s147
      %s162 = sphi 0, %s148
      %s168 = sphi 0, %s170
      %s171 = sphi 0, %s168
      %s172 = sphi 0, %s171
      %s188 = sphi 0, %s172
      %s194 = sphi 0, %s196
      %s197 = sphi 0, %s194
      %s198 = sphi 0, %s197
      %s214 = sphi 0, %s198
    $region4: #{tpu_custom_call.1} parent=1 // loop_header_branch
      %25 = sbr.rel (%p23) target = $region8
    $region5: #{tpu_custom_call.1} parent=1 // loop_body
      %s27 = ssub.s32 %s22, 1
      %s28 = ssub.s32 %s22, 2
      %s29 = sadd.s32 %s22, 1
      %s30 = ssub.s32 %s22, %s29
      %p31 = scmp.eq.s32.totalorder %s30, 0
      %s33 = sadd.s32 %s32, 1
      %s34 = scalar_select %p31, %s32, %s33
      %p37 = pneg %p31
      %p38 = scmp.eq.s32.totalorder %s22, 1
      %p39 = por %p37, %p38
      %p40 = scmp.ne.s32.totalorder %s32, %s35
      %p41 = scmp.eq.s32.totalorder %s22, 0
      %p42 = por %p40, %p41
      %p43 = scmp.ne.s32.totalorder %s32, %s35
      %p44 = scmp.eq.s32.totalorder %s27, 1
      %p45 = por %p43, %p44
      %p46 = scmp.ne.s32.totalorder %s35, %s36
      %p47 = scmp.eq.s32.totalorder %s27, 0
      %p48 = por %p46, %p47
      %p49 = scmp.ne.s32.totalorder %s35, %s36
      %p50 = scmp.eq.s32.totalorder %s28, 1
      %p51 = por %p49, %p50
      %p53 = scmp.ne.s32.totalorder %s36, %s52
      %p54 = scmp.eq.s32.totalorder %s28, 0
      %p55 = por %p53, %p54
      %s56 = ssub.s32 %s22, %s29
      %p57 = scmp.eq.s32.totalorder %s56, 0
      %s59 = sadd.s32 %s58, 1
      %s60 = scalar_select %p57, %s58, %s59
      %p63 = pneg %p57
      %p64 = scmp.eq.s32.totalorder %s22, 1
      %p65 = por %p63, %p64
      %p66 = scmp.ne.s32.totalorder %s58, %s61
      %p67 = scmp.eq.s32.totalorder %s22, 0
      %p68 = por %p66, %p67
      %p69 = scmp.ne.s32.totalorder %s58, %s61
      %p70 = scmp.eq.s32.totalorder %s27, 1
      %p71 = por %p69, %p70
      %p72 = scmp.ne.s32.totalorder %s61, %s62
      %p73 = scmp.eq.s32.totalorder %s27, 0
      %p74 = por %p72, %p73
      %p75 = scmp.ne.s32.totalorder %s61, %s62
      %p76 = scmp.eq.s32.totalorder %s28, 1
      %p77 = por %p75, %p76
      %p79 = scmp.ne.s32.totalorder %s62, %s78
      %p80 = scmp.eq.s32.totalorder %s28, 0
      %p81 = por %p79, %p80
      %s83 = sadd.s32 %s82, 1
      %p86 = scmp.eq.s32.totalorder %s22, 1
      %p87 = scmp.ne.s32.totalorder %s82, %s84
      %p88 = scmp.eq.s32.totalorder %s22, 0
      %p89 = por %p87, %p88
      %p90 = scmp.ne.s32.totalorder %s82, %s84
      %p91 = scmp.eq.s32.totalorder %s27, 1
      %p92 = por %p90, %p91
      %p93 = scmp.ne.s32.totalorder %s84, %s85
      %p94 = scmp.eq.s32.totalorder %s27, 0
      %p95 = por %p93, %p94
      %p96 = scmp.ne.s32.totalorder %s84, %s85
      %p97 = scmp.eq.s32.totalorder %s28, 1
      %p98 = por %p96, %p97
      %p100 = scmp.ne.s32.totalorder %s85, %s99
      %p101 = scmp.eq.s32.totalorder %s28, 0
      %p102 = por %p100, %p101
      %s104 = sadd.s32 %s103, 1
      %p107 = scmp.eq.s32.totalorder %s22, 1
      %p108 = scmp.ne.s32.totalorder %s103, %s105
      %p109 = scmp.eq.s32.totalorder %s22, 0
      %p110 = por %p108, %p109
      %p111 = scmp.ne.s32.totalorder %s103, %s105
      %p112 = scmp.eq.s32.totalorder %s27, 1
      %p113 = por %p111, %p112
      %p114 = scmp.ne.s32.totalorder %s105, %s106
      %p115 = scmp.eq.s32.totalorder %s27, 0
      %p116 = por %p114, %p115
      %p117 = scmp.ne.s32.totalorder %s105, %s106
      %p118 = scmp.eq.s32.totalorder %s28, 1
      %p119 = por %p117, %p118
      %p121 = scmp.ne.s32.totalorder %s106, %s120
      %p122 = scmp.eq.s32.totalorder %s28, 0
      %p123 = por %p121, %p122
      %s125 = sadd.s32 %s124, 1
      %p128 = scmp.eq.s32.totalorder %s22, 1
      %p129 = scmp.ne.s32.totalorder %s124, %s126
      %p130 = scmp.eq.s32.totalorder %s22, 0
      %p131 = por %p129, %p130
      %p132 = scmp.ne.s32.totalorder %s124, %s126
      %p133 = scmp.eq.s32.totalorder %s27, 1
      %p134 = por %p132, %p133
      %p135 = scmp.ne.s32.totalorder %s126, %s127
      %p136 = scmp.eq.s32.totalorder %s27, 0
      %p137 = por %p135, %p136
      %p138 = scmp.ne.s32.totalorder %s126, %s127
      %p139 = scmp.eq.s32.totalorder %s28, 1
      %p140 = por %p138, %p139
      %p142 = scmp.ne.s32.totalorder %s127, %s141
      %p143 = scmp.eq.s32.totalorder %s28, 0
      %p144 = por %p142, %p143
      %s146 = sadd.s32 %s145, 1
      %p149 = scmp.eq.s32.totalorder %s22, 1
      %p150 = scmp.ne.s32.totalorder %s145, %s147
      %p151 = scmp.eq.s32.totalorder %s22, 0
      %p152 = por %p150, %p151
      %p153 = scmp.ne.s32.totalorder %s145, %s147
      %p154 = scmp.eq.s32.totalorder %s27, 1
      %p155 = por %p153, %p154
      %p156 = scmp.ne.s32.totalorder %s147, %s148
      %p157 = scmp.eq.s32.totalorder %s27, 0
      %p158 = por %p156, %p157
      %p159 = scmp.ne.s32.totalorder %s147, %s148
      %p160 = scmp.eq.s32.totalorder %s28, 1
      %p161 = por %p159, %p160
      %p163 = scmp.ne.s32.totalorder %s148, %s162
      %p164 = scmp.eq.s32.totalorder %s28, 0
      %p165 = por %p163, %p164
      %s166 = ssub.s32 %s22, %s29
      %p167 = scmp.eq.s32.totalorder %s166, 0
      %s169 = sadd.s32 %s168, 1
      %s170 = scalar_select %p167, %s168, %s169
      %p173 = pneg %p167
      %p174 = scmp.eq.s32.totalorder %s22, 1
      %p175 = por %p173, %p174
      %p176 = scmp.ne.s32.totalorder %s168, %s171
      %p177 = scmp.eq.s32.totalorder %s22, 0
      %p178 = por %p176, %p177
      %p179 = scmp.ne.s32.totalorder %s168, %s171
      %p180 = scmp.eq.s32.totalorder %s27, 1
      %p181 = por %p179, %p180
      %p182 = scmp.ne.s32.totalorder %s171, %s172
      %p183 = scmp.eq.s32.totalorder %s27, 0
      %p184 = por %p182, %p183
      %p185 = scmp.ne.s32.totalorder %s171, %s172
      %p186 = scmp.eq.s32.totalorder %s28, 1
      %p187 = por %p185, %p186
      %p189 = scmp.ne.s32.totalorder %s172, %s188
      %p190 = scmp.eq.s32.totalorder %s28, 0
      %p191 = por %p189, %p190
      %s192 = ssub.s32 %s22, %s29
      %p193 = scmp.eq.s32.totalorder %s192, 0
      %s195 = sadd.s32 %s194, 1
      %s196 = scalar_select %p193, %s194, %s195
      %p199 = pneg %p193
      %p200 = scmp.eq.s32.totalorder %s22, 1
      %p201 = por %p199, %p200
      %p202 = scmp.ne.s32.totalorder %s194, %s197
      %p203 = scmp.eq.s32.totalorder %s22, 0
      %p204 = por %p202, %p203
      %p205 = scmp.ne.s32.totalorder %s194, %s197
      %p206 = scmp.eq.s32.totalorder %s27, 1
      %p207 = por %p205, %p206
      %p208 = scmp.ne.s32.totalorder %s197, %s198
      %p209 = scmp.eq.s32.totalorder %s27, 0
      %p210 = por %p208, %p209
      %p211 = scmp.ne.s32.totalorder %s197, %s198
      %p212 = scmp.eq.s32.totalorder %s28, 1
      %p213 = por %p211, %p212
      %p215 = scmp.ne.s32.totalorder %s198, %s214
      %p216 = scmp.eq.s32.totalorder %s28, 0
      %p217 = por %p215, %p216
      %p218 = scmp.le.s32.totalorder 1, %s22
      %p219 = scmp.lt.s32.totalorder %s22, 3
      %p220 = pnand %p218, %p219
      %p221 = pneg %p220
      // Predicated region
      $region9: #{tpu_custom_call.1} parent=5 // pred_check
        _
      $region10: #{tpu_custom_call.1} parent=5 // pred_check_branch
        %223 = sbr.rel (%p220) target = $region12
      $region11: #{tpu_custom_call.1} parent=5 // pred_region
        %s224 = ssub.s32 %s22, 1
        // Predicated region
        $region13: #{tpu_custom_call.1} parent=11 // pred_check
          %p225 = pneg %p95
        $region14: #{tpu_custom_call.1} parent=11 // pred_check_branch
          %227 = sbr.rel (%p225) target = $region16
        $region15: #{tpu_custom_call.1} parent=11 // pred_region
          _
        $region16: #{tpu_custom_call.1} parent=11 // pred_fallthru
          _
        // Predicated region
        $region17: #{tpu_custom_call.1} parent=11 // pred_check
          %p228 = pneg %p116
        $region18: #{tpu_custom_call.1} parent=11 // pred_check_branch
          %230 = sbr.rel (%p228) target = $region20
        $region19: #{tpu_custom_call.1} parent=11 // pred_region
          _
        $region20: #{tpu_custom_call.1} parent=11 // pred_fallthru
          _
        // Predicated region
        $region21: #{tpu_custom_call.1} parent=11 // pred_check
          %p231 = pneg %p137
        $region22: #{tpu_custom_call.1} parent=11 // pred_check_branch
          %233 = sbr.rel (%p231) target = $region24
        $region23: #{tpu_custom_call.1} parent=11 // pred_region
          _
        $region24: #{tpu_custom_call.1} parent=11 // pred_fallthru
          _
        // Predicated region
        $region25: #{tpu_custom_call.1} parent=11 // pred_check
          %p234 = pneg %p158
        $region26: #{tpu_custom_call.1} parent=11 // pred_check_branch
          %236 = sbr.rel (%p234) target = $region28
        $region27: #{tpu_custom_call.1} parent=11 // pred_region
          _
        $region28: #{tpu_custom_call.1} parent=11 // pred_fallthru
          _
      $region12: #{tpu_custom_call.1} parent=5 // pred_fallthru
        _
      %p237 = scmp.lt.s32.totalorder %s22, 2
      // Predicated region
      $region29: #{tpu_custom_call.1} parent=5 // pred_check
        %p238 = pneg %p237
      $region30: #{tpu_custom_call.1} parent=5 // pred_check_branch
        %240 = sbr.rel (%p238) target = $region32
      $region31: #{tpu_custom_call.1} parent=5 // pred_region
        // Predicated region
        $region33: #{tpu_custom_call.1} parent=31 // pred_check
          %p241 = pneg %p42
        $region34: #{tpu_custom_call.1} parent=31 // pred_check_branch
          %243 = sbr.rel (%p241) target = $region36
        $region35: #{tpu_custom_call.1} parent=31 // pred_region
          %s244 = smul.u32 16, %s22
          %p245 = scmp.lt.s32.totalorder %s244, 31
          %s246 = scalar_select %p245, %s244, 31
          %s247 = smul.addr %s246, 8
          %s248 = scalar_lea.vmem %s0, %s247
          %s249 = smul.u32 16, %s22
        $region36: #{tpu_custom_call.1} parent=31 // pred_fallthru
          _
        // Predicated region
        $region37: #{tpu_custom_call.1} parent=31 // pred_check
          %p250 = pneg %p68
        $region38: #{tpu_custom_call.1} parent=31 // pred_check_branch
          %252 = sbr.rel (%p250) target = $region40
        $region39: #{tpu_custom_call.1} parent=31 // pred_region
          %s253 = smul.u32 16, %s22
          %p254 = scmp.lt.s32.totalorder %s253, 31
          %s255 = scalar_select %p254, %s253, 31
          %s256 = smul.addr %s255, 4
          %s257 = scalar_lea.vmem %s1, %s256
          %s258 = smul.u32 16, %s22
        $region40: #{tpu_custom_call.1} parent=31 // pred_fallthru
          _
      $region32: #{tpu_custom_call.1} parent=5 // pred_fallthru
        _
      %p259 = scmp.le.s32.totalorder 1, %s22
      %p260 = scmp.lt.s32.totalorder %s22, 3
      %p261 = pnand %p259, %p260
      %p262 = pneg %p261
      // Predicated region
      $region41: #{tpu_custom_call.1} parent=5 // pred_check
        _
      $region42: #{tpu_custom_call.1} parent=5 // pred_check_branch
        %264 = sbr.rel (%p261) target = $region44
      $region43: #{tpu_custom_call.1} parent=5 // pred_region
        %s265 = ssub.s32 %s22, 1
        %s266 = smul.u32 16, %s27
        %p267 = scmp.lt.s32.totalorder %s266, 31
        %s268 = scalar_select %p267, %s266, 31
        %s269 = smul.addr %s268, 8
        %s270 = scalar_lea.vmem %s0, %s269
        %p271 = pneg %p48
        %p272 = pneg %p45
        %s273 = smul.u32 16, %s27
        %p274 = scmp.lt.s32.totalorder %s273, 31
        %s275 = scalar_select %p274, %s273, 31
        %s276 = smul.addr %s275, 4
        %s277 = scalar_lea.vmem %s1, %s276
        %p278 = pneg %p74
        %p279 = pneg %p71
        %p280 = pneg %p95
        %p281 = pneg %p92
        %p282 = pneg %p116
        %p283 = pneg %p113
        %p284 = pneg %p137
        %p285 = pneg %p134
        %p286 = pneg %p158
        %p287 = pneg %p155
        %p288 = pneg %p184
        %p289 = pneg %p181
        %s290 = sand.u32 %s171, 1
        %s291 = scalar_lea.sflag [#allocation4], %s290
        %s292 = sand.u32 %s171, 1
        %s293 = smul.addr %s292, 64
        %s294 = scalar_lea.vmem [#allocation3], %s293
        %p295 = pneg %p210
        %p296 = pneg %p207
        %s297 = sand.u32 %s197, 1
        %s298 = scalar_lea.sflag [#allocation6], %s297
        %s299 = sand.u32 %s197, 1
        %s300 = smul.addr %s299, 8
        %s301 = scalar_lea.vmem [#allocation5], %s300
        %s302 = smul.u32 16, %s27
        %p303 = scmp.lt.s32.totalorder %s302, 31
        %s304 = scalar_select %p303, %s302, 31
        %s305 = smul.addr %s304, 8
        %s306 = scalar_lea.vmem %s0, %s305
        %s307 = smul.u32 16, %s27
        %s308 = smul.u32 16, %s27
        %p309 = scmp.lt.s32.totalorder %s308, 31
        %s310 = scalar_select %p309, %s308, 31
        %s311 = smul.addr %s310, 4
        %s312 = scalar_lea.vmem %s1, %s311
        %s313 = smul.u32 16, %s27
        %s314 = smul.u32 16, %s27
        %v315 = vld [vmem:[%s306] sm:$0xff]
        %v316 = vld [vmem:[%s306 + $0x8] sm:$0xff]
        %v317 = vld [vmem:[%s306 + $0x10] sm:$0xff]
        %v318 = vld [vmem:[%s306 + $0x18] sm:$0xff]
        %v319 = vld [vmem:[%s306 + $0x20] sm:$0xff]
        %v320 = vld [vmem:[%s306 + $0x28] sm:$0xff]
        %v321 = vld [vmem:[%s306 + $0x30] sm:$0xff]
        %v322 = vld [vmem:[%s306 + $0x38] sm:$0xff]
        %v323 = vld [vmem:[%s306 + $0x40] sm:$0xff]
        %v324 = vld [vmem:[%s306 + $0x48] sm:$0xff]
        %v325 = vld [vmem:[%s306 + $0x50] sm:$0xff]
        %v326 = vld [vmem:[%s306 + $0x58] sm:$0xff]
        %v327 = vld [vmem:[%s306 + $0x60] sm:$0xff]
        %v328 = vld [vmem:[%s306 + $0x68] sm:$0xff]
        %v329 = vld [vmem:[%s306 + $0x70] sm:$0xff]
        %v330 = vld [vmem:[%s306 + $0x78] sm:$0xff]
        %v331 = vlaneseq
        %v332 = vand.u32 %v331, 127
        %333 = vset.pattern.permute.xlu0 0
        %334 = vperm.xlu0 %333, %v315
        %v335 = vpop.permute.xlu0 %334
        %336 = vset.pattern.permute.xlu0 0
        %337 = vperm.xlu0 %336, %v316
        %v338 = vpop.permute.xlu0 %337
        %339 = vset.pattern.permute.xlu0 0
        %340 = vperm.xlu0 %339, %v317
        %v341 = vpop.permute.xlu0 %340
        %342 = vset.pattern.permute.xlu0 0
        %343 = vperm.xlu0 %342, %v318
        %v344 = vpop.permute.xlu0 %343
        %345 = vset.pattern.permute.xlu0 0
        %346 = vperm.xlu0 %345, %v319
        %v347 = vpop.permute.xlu0 %346
        %348 = vset.pattern.permute.xlu0 0
        %349 = vperm.xlu0 %348, %v320
        %v350 = vpop.permute.xlu0 %349
        %351 = vset.pattern.permute.xlu0 0
        %352 = vperm.xlu0 %351, %v321
        %v353 = vpop.permute.xlu0 %352
        %354 = vset.pattern.permute.xlu0 0
        %355 = vperm.xlu0 %354, %v322
        %v356 = vpop.permute.xlu0 %355
        %357 = vset.pattern.permute.xlu0 0
        %358 = vperm.xlu0 %357, %v323
        %v359 = vpop.permute.xlu0 %358
        %360 = vset.pattern.permute.xlu0 0
        %361 = vperm.xlu0 %360, %v324
        %v362 = vpop.permute.xlu0 %361
        %363 = vset.pattern.permute.xlu0 0
        %364 = vperm.xlu0 %363, %v325
        %v365 = vpop.permute.xlu0 %364
        %366 = vset.pattern.permute.xlu0 0
        %367 = vperm.xlu0 %366, %v326
        %v368 = vpop.permute.xlu0 %367
        %369 = vset.pattern.permute.xlu0 0
        %370 = vperm.xlu0 %369, %v327
        %v371 = vpop.permute.xlu0 %370
        %372 = vset.pattern.permute.xlu0 0
        %373 = vperm.xlu0 %372, %v328
        %v374 = vpop.permute.xlu0 %373
        %375 = vset.pattern.permute.xlu0 0
        %376 = vperm.xlu0 %375, %v329
        %v377 = vpop.permute.xlu0 %376
        %378 = vset.pattern.permute.xlu0 0
        %379 = vperm.xlu0 %378, %v330
        %v380 = vpop.permute.xlu0 %379
        %vm381 = vcmp.eq.s32.totalorder %v335, %v332
        %vm382 = vcmp.eq.s32.totalorder %v338, %v332
        %vm383 = vcmp.eq.s32.totalorder %v341, %v332
        %vm384 = vcmp.eq.s32.totalorder %v344, %v332
        %vm385 = vcmp.eq.s32.totalorder %v347, %v332
        %vm386 = vcmp.eq.s32.totalorder %v350, %v332
        %vm387 = vcmp.eq.s32.totalorder %v353, %v332
        %vm388 = vcmp.eq.s32.totalorder %v356, %v332
        %vm389 = vcmp.eq.s32.totalorder %v359, %v332
        %vm390 = vcmp.eq.s32.totalorder %v362, %v332
        %vm391 = vcmp.eq.s32.totalorder %v365, %v332
        %vm392 = vcmp.eq.s32.totalorder %v368, %v332
        %vm393 = vcmp.eq.s32.totalorder %v371, %v332
        %vm394 = vcmp.eq.s32.totalorder %v374, %v332
        %vm395 = vcmp.eq.s32.totalorder %v377, %v332
        %vm396 = vcmp.eq.s32.totalorder %v380, %v332
        %v397 = vsel %vm381, 1, 0
        %v398 = vsel %vm382, 1, 0
        %v399 = vsel %vm383, 1, 0
        %v400 = vsel %vm384, 1, 0
        %v401 = vsel %vm385, 1, 0
        %v402 = vsel %vm386, 1, 0
        %v403 = vsel %vm387, 1, 0
        %v404 = vsel %vm388, 1, 0
        %v405 = vsel %vm389, 1, 0
        %v406 = vsel %vm390, 1, 0
        %v407 = vsel %vm391, 1, 0
        %v408 = vsel %vm392, 1, 0
        %v409 = vsel %vm393, 1, 0
        %v410 = vsel %vm394, 1, 0
        %v411 = vsel %vm395, 1, 0
        %v412 = vsel %vm396, 1, 0
        %v413 = vcvt.s32.f32 %v397
        %v414 = vcvt.s32.f32 %v398
        %v415 = vcvt.s32.f32 %v399
        %v416 = vcvt.s32.f32 %v400
        %v417 = vcvt.s32.f32 %v401
        %v418 = vcvt.s32.f32 %v402
        %v419 = vcvt.s32.f32 %v403
        %v420 = vcvt.s32.f32 %v404
        %v421 = vcvt.s32.f32 %v405
        %v422 = vcvt.s32.f32 %v406
        %v423 = vcvt.s32.f32 %v407
        %v424 = vcvt.s32.f32 %v408
        %v425 = vcvt.s32.f32 %v409
        %v426 = vcvt.s32.f32 %v410
        %v427 = vcvt.s32.f32 %v411
        %v428 = vcvt.s32.f32 %v412
        %v429 = vld [vmem:[%s2] sm:$0xff]
        %v430 = vld [vmem:[%s2 + $0x8] sm:$0xff]
        %v431 = vld [vmem:[%s2 + $0x10] sm:$0xff]
        %v432 = vld [vmem:[%s2 + $0x18] sm:$0xff]
        %v433 = vld [vmem:[%s2 + $0x20] sm:$0xff]
        %v434 = vld [vmem:[%s2 + $0x28] sm:$0xff]
        %v435 = vld [vmem:[%s2 + $0x30] sm:$0xff]
        %v436 = vld [vmem:[%s2 + $0x38] sm:$0xff]
        %v437 = vld [vmem:[%s2 + $0x40] sm:$0xff]
        %v438 = vld [vmem:[%s2 + $0x48] sm:$0xff]
        %v439 = vld [vmem:[%s2 + $0x50] sm:$0xff]
        %v440 = vld [vmem:[%s2 + $0x58] sm:$0xff]
        %v441 = vld [vmem:[%s2 + $0x60] sm:$0xff]
        %v442 = vld [vmem:[%s2 + $0x68] sm:$0xff]
        %v443 = vld [vmem:[%s2 + $0x70] sm:$0xff]
        %v444 = vld [vmem:[%s2 + $0x78] sm:$0xff]
        %v445 = vld [vmem:[%s3] sm:$0x1]
        %v447 = vlaneseq
        %v448 = vshrl.u32 %v447, 7
        %v449 = vsub.s32 0, %v448
        %v450 = vrot.slane %v445, %v449
        %452 = vmatprep.subr.mxu0 0.0
        %453 = vmatpush1.msra.mxu0 %v444
        %454 = vmatprep.subr.mxu0 0.0
        %455 = vmatpush1.msra.mxu0 %v443
        %456 = vmatprep.subr.mxu0 0.0
        %457 = vmatpush1.msra.mxu0 %v442
        %458 = vmatprep.subr.mxu0 0.0
        %459 = vmatpush1.msra.mxu0 %v441
        %460 = vmatprep.subr.mxu0 0.0
        %461 = vmatpush1.msra.mxu0 %v440
        %462 = vmatprep.subr.mxu0 0.0
        %463 = vmatpush1.msra.mxu0 %v439
        %464 = vmatprep.subr.mxu0 0.0
        %465 = vmatpush1.msra.mxu0 %v438
        %466 = vmatprep.subr.mxu0 0.0
        %467 = vmatpush1.msra.mxu0 %v437
        %468 = vmatprep.subr.mxu0 0.0
        %469 = vmatpush1.msra.mxu0 %v436
        %470 = vmatprep.subr.mxu0 0.0
        %471 = vmatpush1.msra.mxu0 %v435
        %472 = vmatprep.subr.mxu0 0.0
        %473 = vmatpush1.msra.mxu0 %v434
        %474 = vmatprep.subr.mxu0 0.0
        %475 = vmatpush1.msra.mxu0 %v433
        %476 = vmatprep.subr.mxu0 0.0
        %477 = vmatpush1.msra.mxu0 %v432
        %478 = vmatprep.subr.mxu0 0.0
        %479 = vmatpush1.msra.mxu0 %v431
        %480 = vmatprep.subr.mxu0 0.0
        %481 = vmatpush1.msra.mxu0 %v430
        %482 = vmatprep.subr.mxu0 0.0
        %483 = vmatpush1.msra.mxu0 %v429
        %484 = vmatprep.subr.mxu0 0.0
        %485 = vmatpush2.msra.mxu0 0.0
        %486 = vmatprep.subr.mxu0 0.0
        %487 = vmatpush2.msra.mxu0 0.0
        %488 = vmatprep.subr.mxu0 0.0
        %489 = vmatpush2.msra.mxu0 0.0
        %490 = vmatprep.subr.mxu0 0.0
        %491 = vmatpush2.msra.mxu0 0.0
        %492 = vmatprep.subr.mxu0 0.0
        %493 = vmatpush2.msra.mxu0 0.0
        %494 = vmatprep.subr.mxu0 0.0
        %495 = vmatpush2.msra.mxu0 0.0
        %496 = vmatprep.subr.mxu0 0.0
        %497 = vmatpush2.msra.mxu0 0.0
        %498 = vmatprep.subr.mxu0 0.0
        %499 = vmatpush2.msra.mxu0 0.0
        %500 = vmatprep.subr.mxu0 0.0
        %501 = vmatpush2.msra.mxu0 0.0
        %502 = vmatprep.subr.mxu0 0.0
        %503 = vmatpush2.msra.mxu0 0.0
        %504 = vmatprep.subr.mxu0 0.0
        %505 = vmatpush2.msra.mxu0 0.0
        %506 = vmatprep.subr.mxu0 0.0
        %507 = vmatpush2.msra.mxu0 0.0
        %508 = vmatprep.subr.mxu0 0.0
        %509 = vmatpush2.msra.mxu0 0.0
        %510 = vmatprep.subr.mxu0 0.0
        %511 = vmatpush2.msra.mxu0 0.0
        %512 = vmatprep.subr.mxu0 0.0
        %513 = vmatpush2.msra.mxu0 0.0
        %514 = vmatprep.subr.mxu0 0.0
        %515 = vmatpush2.msra.mxu0 0.0
        %516 = vmatprep.mubr.f32.mxu0 0.0
        %517 = vmatmul.mubr.f32.gmra.mxu0 %v413
        %v518 = vpop.f32.mrf.mxu0
        %v519 = vadd.f32 %v450, %v518
        %v520 = vpop.f32.mrf.mxu0
        %521 = vmatprep.mubr.f32.mxu0 0.0
        %522 = vmatmul.mubr.f32.gmra.mxu0 %v414
        %v523 = vpop.f32.mrf.mxu0
        %v524 = vadd.f32 %v450, %v523
        %v525 = vpop.f32.mrf.mxu0
        %526 = vmatprep.mubr.f32.mxu0 0.0
        %527 = vmatmul.mubr.f32.gmra.mxu0 %v415
        %v528 = vpop.f32.mrf.mxu0
        %v529 = vadd.f32 %v450, %v528
        %v530 = vpop.f32.mrf.mxu0
        %531 = vmatprep.mubr.f32.mxu0 0.0
        %532 = vmatmul.mubr.f32.gmra.mxu0 %v416
        %v533 = vpop.f32.mrf.mxu0
        %v534 = vadd.f32 %v450, %v533
        %v535 = vpop.f32.mrf.mxu0
        %536 = vmatprep.mubr.f32.mxu0 0.0
        %537 = vmatmul.mubr.f32.gmra.mxu0 %v417
        %v538 = vpop.f32.mrf.mxu0
        %v539 = vadd.f32 %v450, %v538
        %v540 = vpop.f32.mrf.mxu0
        %541 = vmatprep.mubr.f32.mxu0 0.0
        %542 = vmatmul.mubr.f32.gmra.mxu0 %v418
        %v543 = vpop.f32.mrf.mxu0
        %v544 = vadd.f32 %v450, %v543
        %v545 = vpop.f32.mrf.mxu0
        %546 = vmatprep.mubr.f32.mxu0 0.0
        %547 = vmatmul.mubr.f32.gmra.mxu0 %v419
        %v548 = vpop.f32.mrf.mxu0
        %v549 = vadd.f32 %v450, %v548
        %v550 = vpop.f32.mrf.mxu0
        %551 = vmatprep.mubr.f32.mxu0 0.0
        %552 = vmatmul.mubr.f32.gmra.mxu0 %v420
        %v553 = vpop.f32.mrf.mxu0
        %v554 = vadd.f32 %v450, %v553
        %v555 = vpop.f32.mrf.mxu0
        %556 = vmatprep.mubr.f32.mxu0 0.0
        %557 = vmatmul.mubr.f32.gmra.mxu0 %v421
        %v558 = vpop.f32.mrf.mxu0
        %v559 = vadd.f32 %v450, %v558
        %v560 = vpop.f32.mrf.mxu0
        %561 = vmatprep.mubr.f32.mxu0 0.0
        %562 = vmatmul.mubr.f32.gmra.mxu0 %v422
        %v563 = vpop.f32.mrf.mxu0
        %v564 = vadd.f32 %v450, %v563
        %v565 = vpop.f32.mrf.mxu0
        %566 = vmatprep.mubr.f32.mxu0 0.0
        %567 = vmatmul.mubr.f32.gmra.mxu0 %v423
        %v568 = vpop.f32.mrf.mxu0
        %v569 = vadd.f32 %v450, %v568
        %v570 = vpop.f32.mrf.mxu0
        %571 = vmatprep.mubr.f32.mxu0 0.0
        %572 = vmatmul.mubr.f32.gmra.mxu0 %v424
        %v573 = vpop.f32.mrf.mxu0
        %v574 = vadd.f32 %v450, %v573
        %v575 = vpop.f32.mrf.mxu0
        %576 = vmatprep.mubr.f32.mxu0 0.0
        %577 = vmatmul.mubr.f32.gmra.mxu0 %v425
        %v578 = vpop.f32.mrf.mxu0
        %v579 = vadd.f32 %v450, %v578
        %v580 = vpop.f32.mrf.mxu0
        %581 = vmatprep.mubr.f32.mxu0 0.0
        %582 = vmatmul.mubr.f32.gmra.mxu0 %v426
        %v583 = vpop.f32.mrf.mxu0
        %v584 = vadd.f32 %v450, %v583
        %v585 = vpop.f32.mrf.mxu0
        %586 = vmatprep.mubr.f32.mxu0 0.0
        %587 = vmatmul.mubr.f32.gmra.mxu0 %v427
        %v588 = vpop.f32.mrf.mxu0
        %v589 = vadd.f32 %v450, %v588
        %v590 = vpop.f32.mrf.mxu0
        %591 = vmatprep.mubr.f32.mxu0 0.0
        %592 = vmatmul.mubr.f32.gmra.mxu0 %v428
        %v593 = vpop.f32.mrf.mxu0
        %v594 = vadd.f32 %v450, %v593
        %v595 = vpop.f32.mrf.mxu0
        %596 = vdwg.mxu0
        %v597 = vtanh.pop %v519
        %v598 = vtanh.pop %v524
        %v599 = vtanh.pop %v529
        %v600 = vtanh.pop %v534
        %v601 = vtanh.pop %v539
        %v602 = vtanh.pop %v544
        %v603 = vtanh.pop %v549
        %v604 = vtanh.pop %v554
        %v605 = vtanh.pop %v559
        %v606 = vtanh.pop %v564
        %v607 = vtanh.pop %v569
        %v608 = vtanh.pop %v574
        %v609 = vtanh.pop %v579
        %v610 = vtanh.pop %v584
        %v611 = vtanh.pop %v589
        %v612 = vtanh.pop %v594
        %v613 = vld [vmem:[%s312] sm:$0xf]
        %v614 = vld [vmem:[%s312 + $0x4] sm:$0xf]
        %v615 = vld [vmem:[%s312 + $0x8] sm:$0xf]
        %v616 = vld [vmem:[%s312 + $0xc] sm:$0xf]
        %v617 = vld [vmem:[%s312 + $0x10] sm:$0xf]
        %v618 = vld [vmem:[%s312 + $0x14] sm:$0xf]
        %v619 = vld [vmem:[%s312 + $0x18] sm:$0xf]
        %v620 = vld [vmem:[%s312 + $0x1c] sm:$0xf]
        %v621 = vld [vmem:[%s312 + $0x20] sm:$0xf]
        %v622 = vld [vmem:[%s312 + $0x24] sm:$0xf]
        %v623 = vld [vmem:[%s312 + $0x28] sm:$0xf]
        %v624 = vld [vmem:[%s312 + $0x2c] sm:$0xf]
        %v625 = vld [vmem:[%s312 + $0x30] sm:$0xf]
        %v626 = vld [vmem:[%s312 + $0x34] sm:$0xf]
        %v627 = vld [vmem:[%s312 + $0x38] sm:$0xf]
        %v628 = vld [vmem:[%s312 + $0x3c] sm:$0xf]
        %v629 = vunpack.c.l.bf16 %v613
        %v630 = vunpack.c.l.bf16 %v614
        %v631 = vunpack.c.l.bf16 %v615
        %v632 = vunpack.c.l.bf16 %v616
        %v633 = vunpack.c.l.bf16 %v617
        %v634 = vunpack.c.l.bf16 %v618
        %v635 = vunpack.c.l.bf16 %v619
        %v636 = vunpack.c.l.bf16 %v620
        %v637 = vunpack.c.l.bf16 %v621
        %v638 = vunpack.c.l.bf16 %v622
        %v639 = vunpack.c.l.bf16 %v623
        %v640 = vunpack.c.l.bf16 %v624
        %v641 = vunpack.c.l.bf16 %v625
        %v642 = vunpack.c.l.bf16 %v626
        %v643 = vunpack.c.l.bf16 %v627
        %v644 = vunpack.c.l.bf16 %v628
        %646 = vset.pattern.permute.xlu0 0
        %647 = vperm.xlu0 %646, %v629
        %v648 = vpop.permute.xlu0 %647
        %651 = vset.pattern.permute.xlu0 0
        %652 = vperm.xlu0 %651, %v630
        %v653 = vpop.permute.xlu0 %652
        %656 = vset.pattern.permute.xlu0 0
        %657 = vperm.xlu0 %656, %v631
        %v658 = vpop.permute.xlu0 %657
        %661 = vset.pattern.permute.xlu0 0
        %662 = vperm.xlu0 %661, %v632
        %v663 = vpop.permute.xlu0 %662
        %666 = vset.pattern.permute.xlu0 0
        %667 = vperm.xlu0 %666, %v633
        %v668 = vpop.permute.xlu0 %667
        %671 = vset.pattern.permute.xlu0 0
        %672 = vperm.xlu0 %671, %v634
        %v673 = vpop.permute.xlu0 %672
        %676 = vset.pattern.permute.xlu0 0
        %677 = vperm.xlu0 %676, %v635
        %v678 = vpop.permute.xlu0 %677
        %681 = vset.pattern.permute.xlu0 0
        %682 = vperm.xlu0 %681, %v636
        %v683 = vpop.permute.xlu0 %682
        %686 = vset.pattern.permute.xlu0 0
        %687 = vperm.xlu0 %686, %v637
        %v688 = vpop.permute.xlu0 %687
        %691 = vset.pattern.permute.xlu0 0
        %692 = vperm.xlu0 %691, %v638
        %v693 = vpop.permute.xlu0 %692
        %696 = vset.pattern.permute.xlu0 0
        %697 = vperm.xlu0 %696, %v639
        %v698 = vpop.permute.xlu0 %697
        %701 = vset.pattern.permute.xlu0 0
        %702 = vperm.xlu0 %701, %v640
        %v703 = vpop.permute.xlu0 %702
        %706 = vset.pattern.permute.xlu0 0
        %707 = vperm.xlu0 %706, %v641
        %v708 = vpop.permute.xlu0 %707
        %711 = vset.pattern.permute.xlu0 0
        %712 = vperm.xlu0 %711, %v642
        %v713 = vpop.permute.xlu0 %712
        %716 = vset.pattern.permute.xlu0 0
        %717 = vperm.xlu0 %716, %v643
        %v718 = vpop.permute.xlu0 %717
        %721 = vset.pattern.permute.xlu0 0
        %722 = vperm.xlu0 %721, %v644
        %v723 = vpop.permute.xlu0 %722
        %v725 = vmul.f32 %v597, %v648
        %v726 = vmul.f32 %v598, %v653
        %v727 = vmul.f32 %v599, %v658
        %v728 = vmul.f32 %v600, %v663
        %v729 = vmul.f32 %v601, %v668
        %v730 = vmul.f32 %v602, %v673
        %v731 = vmul.f32 %v603, %v678
        %v732 = vmul.f32 %v604, %v683
        %v733 = vmul.f32 %v605, %v688
        %v734 = vmul.f32 %v606, %v693
        %v735 = vmul.f32 %v607, %v698
        %v736 = vmul.f32 %v608, %v703
        %v737 = vmul.f32 %v609, %v708
        %v738 = vmul.f32 %v610, %v713
        %v739 = vmul.f32 %v611, %v718
        %v740 = vmul.f32 %v612, %v723
        %v741 = vpack.c.bf16 %v726, %v725
        %v742 = vpack.c.bf16 %v728, %v727
        %v743 = vpack.c.bf16 %v730, %v729
        %v744 = vpack.c.bf16 %v732, %v731
        %v745 = vpack.c.bf16 %v734, %v733
        %v746 = vpack.c.bf16 %v736, %v735
        %v747 = vpack.c.bf16 %v738, %v737
        %v748 = vpack.c.bf16 %v740, %v739
        %v757 = vunpack.c.l.b16 %v741
        %v758 = vunpack.c.h.b16 %v741
        %v759 = vunpack.c.l.b16 %v742
        %v760 = vunpack.c.h.b16 %v742
        %v761 = vunpack.c.l.b16 %v743
        %v762 = vunpack.c.h.b16 %v743
        %v763 = vunpack.c.l.b16 %v744
        %v764 = vunpack.c.h.b16 %v744
        %v765 = vunpack.c.l.b16 %v745
        %v766 = vunpack.c.h.b16 %v745
        %v767 = vunpack.c.l.b16 %v746
        %v768 = vunpack.c.h.b16 %v746
        %v769 = vunpack.c.l.b16 %v747
        %v770 = vunpack.c.h.b16 %v747
        %v771 = vunpack.c.l.b16 %v748
        %v772 = vunpack.c.h.b16 %v748
        %v773 = vpack.c.b16 %v757, %v757
        %v774 = vpack.c.b16 %v758, %v758
        %v775 = vpack.c.b16 %v759, %v759
        %v776 = vpack.c.b16 %v760, %v760
        %v777 = vpack.c.b16 %v761, %v761
        %v778 = vpack.c.b16 %v762, %v762
        %v779 = vpack.c.b16 %v763, %v763
        %v780 = vpack.c.b16 %v764, %v764
        %v781 = vpack.c.b16 %v765, %v765
        %v782 = vpack.c.b16 %v766, %v766
        %v783 = vpack.c.b16 %v767, %v767
        %v784 = vpack.c.b16 %v768, %v768
        %v785 = vpack.c.b16 %v769, %v769
        %v786 = vpack.c.b16 %v770, %v770
        %v787 = vpack.c.b16 %v771, %v771
        %v788 = vpack.c.b16 %v772, %v772
        %805 = vst [vmem:[%s294] sm:$0xf] %v773
        %806 = vst [vmem:[%s294 + $0x4] sm:$0xf] %v774
        %807 = vst [vmem:[%s294 + $0x8] sm:$0xf] %v775
        %808 = vst [vmem:[%s294 + $0xc] sm:$0xf] %v776
        %809 = vst [vmem:[%s294 + $0x10] sm:$0xf] %v777
        %810 = vst [vmem:[%s294 + $0x14] sm:$0xf] %v778
        %811 = vst [vmem:[%s294 + $0x18] sm:$0xf] %v779
        %812 = vst [vmem:[%s294 + $0x1c] sm:$0xf] %v780
        %813 = vst [vmem:[%s294 + $0x20] sm:$0xf] %v781
        %814 = vst [vmem:[%s294 + $0x24] sm:$0xf] %v782
        %815 = vst [vmem:[%s294 + $0x28] sm:$0xf] %v783
        %816 = vst [vmem:[%s294 + $0x2c] sm:$0xf] %v784
        %817 = vst [vmem:[%s294 + $0x30] sm:$0xf] %v785
        %818 = vst [vmem:[%s294 + $0x34] sm:$0xf] %v786
        %819 = vst [vmem:[%s294 + $0x38] sm:$0xf] %v787
        %820 = vst [vmem:[%s294 + $0x3c] sm:$0xf] %v788
        %v821 = vld [vmem:[%s4] sm:$0x1]
        %v823 = vlaneseq
        %v824 = vshrl.u32 %v823, 7
        %v825 = vsub.s32 0, %v824
        %v826 = vrot.slane %v821, %v825
        %v828 = vmul.f32 %v725, %v826
        %v829 = vmul.f32 %v727, %v826
        %v830 = vmul.f32 %v729, %v826
        %v831 = vmul.f32 %v731, %v826
        %v832 = vmul.f32 %v733, %v826
        %v833 = vmul.f32 %v735, %v826
        %v834 = vmul.f32 %v737, %v826
        %v835 = vmul.f32 %v739, %v826
        %v844 = vrot.slane %v829, 7
        %vm845 = vcmask 1041409
        %v846 = vsel %vm845, %v844, %v828
        %v847 = vrot.slane %v830, 6
        %vm848 = vcmask 1042434
        %v849 = vsel %vm848, %v847, %v846
        %v850 = vrot.slane %v831, 5
        %vm851 = vcmask 1043459
        %v852 = vsel %vm851, %v850, %v849
        %v853 = vrot.slane %v832, 4
        %vm854 = vcmask 1044484
        %v855 = vsel %vm854, %v853, %v852
        %v856 = vrot.slane %v833, 3
        %vm857 = vcmask 1045509
        %v858 = vsel %vm857, %v856, %v855
        %v859 = vrot.slane %v834, 2
        %vm860 = vcmask 1046534
        %v861 = vsel %vm860, %v859, %v858
        %v862 = vrot.slane %v835, 1
        %vm863 = vcmask 1047559
        %v864 = vsel %vm863, %v862, %v861
        %866 = vadd.xlane.f32.xlu0 %v864
        %v867 = vpop.xlane.xlu0 %866
        %v868 = vld [vmem:[#allocation2] sm:$0x1]
        %v870 = vlaneseq
        %v871 = vshrl.u32 %v870, 7
        %v872 = vsub.s32 0, %v871
        %v873 = vrot.slane %v868, %v872
        %v875 = vadd.f32 %v867, %v873
        %877 = vset.pattern.permute.xlu0 0
        %878 = vperm.xlu0 %877, %v875
        %v879 = vpop.permute.xlu0 %878
        %881 = vst [vmem:[%s301] sm:$0xff] %v879
        %s882 = sand.u32 %s171, 1
        %s883 = scalar_lea.sflag [#allocation4], %s882
        %s884 = sand.u32 %s171, 1
        %s885 = smul.addr %s884, 64
        %s886 = scalar_lea.vmem [#allocation3], %s885
        %s887 = sand.u32 %s197, 1
        %s888 = scalar_lea.sflag [#allocation6], %s887
        %s889 = sand.u32 %s197, 1
        %s890 = smul.addr %s889, 8
        %s891 = scalar_lea.vmem [#allocation5], %s890
        // Predicated region
        $region45: #{tpu_custom_call.1} parent=43 // pred_check
          %p892 = pneg %p181
        $region46: #{tpu_custom_call.1} parent=43 // pred_check_branch
          %894 = sbr.rel (%p892) target = $region48
        $region47: #{tpu_custom_call.1} parent=43 // pred_region
          %s895 = smul.u32 16, %s27
          %s897 = ssub.s32 1024, 1024
          %898 = vsyncadd %s883, %s897
          %s899 = smul.addr %s895, 64
          %s900 = scalar_lea.hbm %s6, %s899
          %s901 = sshll.u32 %s886, 4
          %s902 = int_to_ptr.vmem [resolvable:$true] %s901
          %907 = dma.vmem_to_hbm [thread:$0]  %s902, 1024, %s900, %s883, 64, 64, 4
        $region48: #{tpu_custom_call.1} parent=43 // pred_fallthru
          _
        // Predicated region
        $region49: #{tpu_custom_call.1} parent=43 // pred_check
          %p908 = pneg %p207
        $region50: #{tpu_custom_call.1} parent=43 // pred_check_branch
          %910 = sbr.rel (%p908) target = $region52
        $region51: #{tpu_custom_call.1} parent=43 // pred_region
          %s912 = ssub.s32 128, 128
          %913 = vsyncadd %s888, %s912
          %s914 = smul.addr %s27, 128
          %s915 = scalar_lea.hbm %s7, %s914
          %s917 = sshll.u32 %s891, 4
          %s918 = int_to_ptr.vmem [resolvable:$true] %s917
          %920 = dma.vmem_to_hbm [thread:$0]  %s918, 128, %s915, %s888
        $region52: #{tpu_custom_call.1} parent=43 // pred_fallthru
          _
      $region44: #{tpu_custom_call.1} parent=5 // pred_fallthru
        _
      %p921 = scmp.le.s32.totalorder 2, %s22
      // Predicated region
      $region53: #{tpu_custom_call.1} parent=5 // pred_check
        %p922 = pneg %p921
      $region54: #{tpu_custom_call.1} parent=5 // pred_check_branch
        %924 = sbr.rel (%p922) target = $region56
      $region55: #{tpu_custom_call.1} parent=5 // pred_region
        %s925 = ssub.s32 %s22, 2
        // Predicated region
        $region57: #{tpu_custom_call.1} parent=55 // pred_check
          %p926 = pneg %p187
        $region58: #{tpu_custom_call.1} parent=55 // pred_check_branch
          %928 = sbr.rel (%p926) target = $region60
        $region59: #{tpu_custom_call.1} parent=55 // pred_region
          %s929 = sand.u32 %s172, 1
          %s930 = scalar_lea.sflag [#allocation4], %s929
          %s931 = sand.u32 %s172, 1
          %s932 = smul.addr %s931, 64
          %s933 = scalar_lea.vmem [#allocation3], %s932
          %934 = dma.done %s930, 1024
        $region60: #{tpu_custom_call.1} parent=55 // pred_fallthru
          _
        // Predicated region
        $region61: #{tpu_custom_call.1} parent=55 // pred_check
          %p935 = pneg %p213
        $region62: #{tpu_custom_call.1} parent=55 // pred_check_branch
          %937 = sbr.rel (%p935) target = $region64
        $region63: #{tpu_custom_call.1} parent=55 // pred_region
          %s938 = sand.u32 %s198, 1
          %s939 = scalar_lea.sflag [#allocation6], %s938
          %s940 = sand.u32 %s198, 1
          %s941 = smul.addr %s940, 8
          %s942 = scalar_lea.vmem [#allocation5], %s941
          %943 = dma.done %s939, 128
        $region64: #{tpu_custom_call.1} parent=55 // pred_fallthru
          _
      $region56: #{tpu_custom_call.1} parent=5 // pred_fallthru
        _
    $region6: #{tpu_custom_call.1} parent=1 // loop_footer
      %s26 = sadd.s32 1, %s22
    $region7: #{tpu_custom_call.1} parent=1 // loop_footer_branch
      %21 = sbr.rel target = $region3
    $region8: #{tpu_custom_call.1} parent=1 // loop_exit
      _
    %944 = vsyncpa [#allocation4], 1
    %s945 = scalar_lea.sflag [#allocation4], 1
    %946 = vsyncpa %s945, 1
    %947 = vsyncpa [#allocation6], 1
    %s948 = scalar_lea.sflag [#allocation6], 1
    %949 = vsyncpa %s948, 1

</llo_original>
